<compile_context>
chip_gen: v5e
topology: v5e:2x2
jax: 0.10.0
libtpu: 0.0.40
codegen_flags: <defaults>
</compile_context>

<pallas_src>
import functools

import jax
import jax.numpy as jnp
from jax.experimental import pallas as pl
from jax.experimental.pallas import tpu as pltpu


# ----------------------------------------------------------------------------
# Kernels
# ----------------------------------------------------------------------------

def _mlp(avg, mx, w1a_ref, w1m_ref, b1_ref, w2_ref, b2_ref):
    """Linear -> ReLU -> Linear -> Sigmoid on pooled (bt, C) features."""
    h = (jnp.dot(avg, w1a_ref[...], preferred_element_type=jnp.float32)
         + jnp.dot(mx, w1m_ref[...], preferred_element_type=jnp.float32)
         + b1_ref[...])                                        # (bt, hid)
    h = jnp.maximum(h, 0.0)
    s = jnp.dot(h, w2_ref[...], preferred_element_type=jnp.float32) + b2_ref[...]
    return jax.nn.sigmoid(s)                                   # (bt, C)


def _ca_fused_kernel(x_ref, w1a_ref, w1m_ref, b1_ref, w2_ref, b2_ref, o_ref,
                     *, hw_true, padded):
    """Single-pass: pool + MLP + scale on one (bt, C, HW_pad) block."""
    xw = x_ref[...].astype(jnp.float32)                        # widened stream
    if padded:
        lane = jax.lax.broadcasted_iota(jnp.int32, xw.shape, dimension=2)
        valid = lane < hw_true
        pooled_sum = jnp.sum(jnp.where(valid, xw, 0.0), axis=-1)
        pooled_max = jnp.max(jnp.where(valid, xw, -jnp.inf), axis=-1)
    else:
        pooled_sum = jnp.sum(xw, axis=-1)
        pooled_max = jnp.max(xw, axis=-1)
    avg = pooled_sum * (1.0 / hw_true)                         # (bt, C)

    s = _mlp(avg, pooled_max, w1a_ref, w1m_ref, b1_ref, w2_ref, b2_ref)

    # Re-read the ref for the scale pass so the widened f32 temp used for
    # pooling does not have to stay live (matters when x is bf16).
    o_ref[...] = (x_ref[...].astype(jnp.float32) * s[:, :, None]).astype(o_ref.dtype)


def _ca_pool_mlp_kernel(x_ref, w1a_ref, w1m_ref, b1_ref, w2_ref, b2_ref,
                        scale_ref, sum_sc, max_sc, *, hw_true, hw_tile, padded):
    """Two-pass, pass 1: accumulate sum/max over HW tiles, MLP on the last."""
    h_idx = pl.program_id(1)

    @pl.when(h_idx == 0)
    def _():
        sum_sc[...] = jnp.zeros(sum_sc.shape, sum_sc.dtype)
        max_sc[...] = jnp.full(max_sc.shape, -jnp.inf, dtype=max_sc.dtype)

    x = x_ref[...].astype(jnp.float32)                         # (bt, C, hw_tile)
    if padded:
        lane = (h_idx * hw_tile
                + jax.lax.broadcasted_iota(jnp.int32, x.shape, dimension=2))
        valid = lane < hw_true
        tile_sum = jnp.sum(jnp.where(valid, x, 0.0), axis=-1)
        tile_max = jnp.max(jnp.where(valid, x, -jnp.inf), axis=-1)
    else:
        tile_sum = jnp.sum(x, axis=-1)
        tile_max = jnp.max(x, axis=-1)
    sum_sc[...] = sum_sc[...] + tile_sum
    max_sc[...] = jnp.maximum(max_sc[...], tile_max)

    @pl.when(h_idx == pl.num_programs(1) - 1)
    def _():
        avg = sum_sc[...] * (1.0 / hw_true)                    # (bt, C)
        s = _mlp(avg, max_sc[...], w1a_ref, w1m_ref, b1_ref, w2_ref, b2_ref)
        scale_ref[...] = s[:, :, None]                         # (bt, C, 1)


def _ca_scale_kernel(x_ref, scale_ref, o_ref):
    """Two-pass, pass 2: out = x * scale (broadcast over the lane/HW axis)."""
    o_ref[...] = (x_ref[...].astype(jnp.float32) * scale_ref[...]).astype(o_ref.dtype)


# ----------------------------------------------------------------------------
# Wrapper
# ----------------------------------------------------------------------------

def _round_up(x, m):
    return (x + m - 1) // m * m


def _vmem_budget_bytes():
    """~85% of the running chip's physical VMEM (64 MiB fallback, v7x-safe)."""
    try:
        cap = int(pltpu.get_tpu_info().vmem_capacity_bytes)
    except Exception:
        cap = 64 << 20
    return int(cap * 0.85)


def _pick_batch_tile(B, tile_bytes, avail_bytes):
    """Largest divisor of B whose double-buffered in+out tiles fit ~half of
    avail_bytes, preferring enough grid steps (>=8, then >=4, then >=2) to
    amortize per-step overhead and keep both v7x TensorCores busy."""
    half = max(avail_bytes // 2, 4 * tile_bytes)   # bt=1 is always admissible
    fits = [d for d in range(1, B + 1) if B % d == 0 and 4 * d * tile_bytes <= half]
    if not fits:
        fits = [1]
    for min_steps in (8, 4, 2, 1):
        cand = [d for d in fits if B // d >= min_steps]
        if cand:
            return max(cand)
    return 1


def channel_attention(x, w1, b1, w2, b2, *, force_two_pass=False, hw_tile=None):
    """ChannelAttention forward.

    x : (B, C, H, W)                             (f32 or bf16; out follows x)
    w1: (C//2, 2*C), b1: (C//2,)   -- first nn.Linear, PyTorch (out, in) layout
    w2: (C, C//2),   b2: (C,)      -- second nn.Linear
    """
    B, C, H, W = x.shape
    hid = w1.shape[0]
    HW = H * W
    itemsize = jnp.dtype(x.dtype).itemsize

    # Split + transpose W1 so the kernel never concatenates; weights stored as
    # (in, out) so the kernel computes y @ W + b.
    w1_avg = w1[:, :C].T                   # (C, hid)
    w1_max = w1[:, C:].T                   # (C, hid)
    b1_row = b1.reshape(1, hid)
    w2_t = w2.T                            # (hid, C)
    b2_row = b2.reshape(1, C)
    params = (w1_avg, w1_max, b1_row, w2_t, b2_row)
    param_bytes = 2 * sum(int(p.size) * jnp.dtype(p.dtype).itemsize for p in params)

    slack = 2 << 20
    budget = _vmem_budget_bytes()
    avail = max(budget - param_bytes - slack, 1 << 20)

    hw128 = max(_round_up(HW, 128), 128)   # lane-dense spatial extent
    item_bytes = C * hw128 * itemsize      # one batch element's (C, HW_pad) slab
    use_single = (not force_two_pass) and (4 * item_bytes <= avail)

    x_flat = x.reshape(B, C, HW)

    if use_single:
        # ---------------- single-pass streaming path -------------------------
        HW_pad = hw128
        if HW_pad != HW:
            x_flat = jnp.pad(x_flat, ((0, 0), (0, 0), (0, HW_pad - HW)))
        bt = _pick_batch_tile(B, item_bytes, avail)
        vmem_limit = int(min(max(4 * bt * item_bytes + param_bytes + slack, 32 << 20),
                             budget))
        kernel = functools.partial(_ca_fused_kernel,
                                   hw_true=HW, padded=(HW_pad != HW))
        cost = pl.CostEstimate(
            flops=int(B * (2 * C * HW + 4 * C * hid + 2 * hid * C + C * HW)),
            transcendentals=int(B * C),
            bytes_accessed=int(2 * B * C * HW_pad * itemsize))

        out_flat = pl.pallas_call(
            kernel,
            out_shape=jax.ShapeDtypeStruct((B, C, HW_pad), x.dtype),
            grid=(B // bt,),
            in_specs=[
                pl.BlockSpec((bt, C, HW_pad), lambda b: (b, 0, 0)),
                pl.BlockSpec((C, hid), lambda b: (0, 0)),
                pl.BlockSpec((C, hid), lambda b: (0, 0)),
                pl.BlockSpec((1, hid), lambda b: (0, 0)),
                pl.BlockSpec((hid, C), lambda b: (0, 0)),
                pl.BlockSpec((1, C), lambda b: (0, 0)),
            ],
            out_specs=pl.BlockSpec((bt, C, HW_pad), lambda b: (b, 0, 0)),
            compiler_params=pltpu.CompilerParams(
                dimension_semantics=("parallel",),
                vmem_limit_bytes=vmem_limit),
            cost_estimate=cost,
        )(x_flat, *params)
    else:
        # -------- two-pass path: pooling + MLP kernel, then scale kernel -----
        if hw_tile is not None:
            hw_t = max(_round_up(int(hw_tile), 128), 128)
        else:
            hw_t = 128
            while (4 * C * (hw_t * 2) * itemsize <= avail // 2) and (hw_t * 2 < hw128):
                hw_t *= 2
        HW_pad = _round_up(HW, hw_t)
        if HW_pad != HW:
            x_flat = jnp.pad(x_flat, ((0, 0), (0, 0), (0, HW_pad - HW)))
        nh = HW_pad // hw_t
        padded = HW_pad != HW
        tile_bytes = C * hw_t * itemsize
        bt = _pick_batch_tile(B, tile_bytes, avail)
        vmem_limit = int(min(max(4 * bt * tile_bytes + param_bytes + slack, 32 << 20),
                             budget))

        # Pass 1: per-(b, c) sum/max accumulated over HW tiles, MLP on the last
        # tile -> scale of shape (B, C, 1).
        pool_kernel = functools.partial(_ca_pool_mlp_kernel,
                                        hw_true=HW, hw_tile=hw_t, padded=padded)
        scale = pl.pallas_call(
            pool_kernel,
            out_shape=jax.ShapeDtypeStruct((B, C, 1), jnp.float32),
            grid=(B // bt, nh),
            in_specs=[
                pl.BlockSpec((bt, C, hw_t), lambda b, h: (b, 0, h)),
                pl.BlockSpec((C, hid), lambda b, h: (0, 0)),
                pl.BlockSpec((C, hid), lambda b, h: (0, 0)),
                pl.BlockSpec((1, hid), lambda b, h: (0, 0)),
                pl.BlockSpec((hid, C), lambda b, h: (0, 0)),
                pl.BlockSpec((1, C), lambda b, h: (0, 0)),
            ],
            out_specs=pl.BlockSpec((bt, C, 1), lambda b, h: (b, 0, 0)),
            scratch_shapes=[pltpu.VMEM((bt, C), jnp.float32),   # running sum
                            pltpu.VMEM((bt, C), jnp.float32)],  # running max
            compiler_params=pltpu.CompilerParams(
                dimension_semantics=("parallel", "arbitrary"),
                vmem_limit_bytes=vmem_limit),
            cost_estimate=pl.CostEstimate(
                flops=int(B * (2 * C * HW_pad + 4 * C * hid + 2 * hid * C)),
                transcendentals=int(B * C),
                bytes_accessed=int(B * C * HW_pad * itemsize + B * C * 4)),
        )(x_flat, *params)

        # Pass 2: stream x again and apply the per-(b, c) scale.
        out_flat = pl.pallas_call(
            _ca_scale_kernel,
            out_shape=jax.ShapeDtypeStruct((B, C, HW_pad), x.dtype),
            grid=(B // bt, nh),
            in_specs=[
                pl.BlockSpec((bt, C, hw_t), lambda b, h: (b, 0, h)),
                pl.BlockSpec((bt, C, 1), lambda b, h: (b, 0, 0)),
            ],
            out_specs=pl.BlockSpec((bt, C, hw_t), lambda b, h: (b, 0, h)),
            compiler_params=pltpu.CompilerParams(
                dimension_semantics=("parallel", "parallel"),
                vmem_limit_bytes=vmem_limit),
            cost_estimate=pl.CostEstimate(
                flops=int(B * C * HW_pad), transcendentals=0,
                bytes_accessed=int(2 * B * C * HW_pad * itemsize)),
        )(x_flat, scale)

    if HW_pad != HW:
        out_flat = out_flat[:, :, :HW]
    return out_flat.reshape(B, C, H, W)


# ----------------------------------------------------------------------------
# Reference + self-test
# ----------------------------------------------------------------------------

def reference(x, w1, b1, w2, b2):
    avg = jnp.mean(x, axis=(2, 3))
    mx = jnp.max(x, axis=(2, 3))
    y = jnp.concatenate([avg, mx], axis=1)
    h = jnp.maximum(y @ w1.T + b1, 0.0)
    s = jax.nn.sigmoid(h @ w2.T + b2)
    return x * s[:, :, None, None]


if __name__ == "__main__":
    def make_case(key, B, C, H, W):
        hid = C // 2
        kx, k1, k2, k3, k4 = jax.random.split(key, 5)
        x = jax.random.normal(kx, (B, C, H, W), dtype=jnp.float32)
        # Parameters in native PyTorch nn.Linear (out_features, in_features) layout.
        w1 = jax.random.normal(k1, (hid, 2 * C), dtype=jnp.float32) * 0.1
        b1 = jax.random.normal(k2, (hid,), dtype=jnp.float32) * 0.1
        w2 = jax.random.normal(k3, (C, hid), dtype=jnp.float32) * 0.1
        b2 = jax.random.normal(k4, (C,), dtype=jnp.float32) * 0.1
        return x, w1, b1, w2, b2

    key = jax.random.PRNGKey(0)
    k_a, k_b = jax.random.split(key)

    # Case 1: lane-aligned spatial size (H*W = 256) -> single-pass path.
    args = make_case(k_a, 2, 4, 16, 16)
    ref = reference(*args)

    out = channel_attention(*args)
    jax.block_until_ready(out)
    assert out.shape == args[0].shape
    assert jnp.allclose(out, ref, atol=1e-5, rtol=1e-5), "single-pass mismatch"

    # Same inputs through the two-pass fallback (selected automatically when a
    # (C, HW) slab exceeds the VMEM budget; forced here to exercise it).
    out2 = channel_attention(*args, force_two_pass=True, hw_tile=128)
    jax.block_until_ready(out2)
    assert jnp.allclose(out2, ref, atol=1e-5, rtol=1e-5), "two-pass mismatch"

    # Case 2: H*W = 25 (not a multiple of 128) -> lane padding + masked
    # reductions, on both paths.
    args3 = make_case(k_b, 3, 8, 5, 5)
    ref3 = reference(*args3)

    out3 = channel_attention(*args3)
    jax.block_until_ready(out3)
    assert jnp.allclose(out3, ref3, atol=1e-5, rtol=1e-5), "padded single-pass mismatch"

    out4 = channel_attention(*args3, force_two_pass=True)
    jax.block_until_ready(out4)
    assert jnp.allclose(out4, ref3, atol=1e-5, rtol=1e-5), "padded two-pass mismatch"

    print("KERNEL_OK")
</pallas_src>

<mosaic_0001>
module attributes {stable_mosaic.version = 11 : i64} {
  func.func @_ca_fused_kernel(%arg0: i32, %arg1: memref<1x4x256xf32, #tpu.memory_space<vmem>>, %arg2: memref<4x2xf32, #tpu.memory_space<vmem>>, %arg3: memref<4x2xf32, #tpu.memory_space<vmem>>, %arg4: memref<1x2xf32, #tpu.memory_space<vmem>>, %arg5: memref<2x4xf32, #tpu.memory_space<vmem>>, %arg6: memref<1x4xf32, #tpu.memory_space<vmem>>, %arg7: memref<1x4x256xf32, #tpu.memory_space<vmem>>) attributes {dimension_semantics = [#tpu.dimension_semantics<parallel>], iteration_bounds = array<i64: 2>, scalar_prefetch = 0 : i64, scratch_operands = 0 : i64, tpu.core_type = #tpu.core_type<tc>, window_params = [{transform_indices = @transform_0, window_bounds = array<i64: 1, 4, 256>}, {pipeline_mode = #tpu.pipeline_mode<synchronous>, transform_indices = @transform_1, window_bounds = array<i64: 4, 2>}, {pipeline_mode = #tpu.pipeline_mode<synchronous>, transform_indices = @transform_2, window_bounds = array<i64: 4, 2>}, {pipeline_mode = #tpu.pipeline_mode<synchronous>, transform_indices = @transform_3, window_bounds = array<i64: 1, 2>}, {pipeline_mode = #tpu.pipeline_mode<synchronous>, transform_indices = @transform_4, window_bounds = array<i64: 2, 4>}, {pipeline_mode = #tpu.pipeline_mode<synchronous>, transform_indices = @transform_5, window_bounds = array<i64: 1, 4>}, {transform_indices = @transform_6, window_bounds = array<i64: 1, 4, 256>}]} {
    %c0 = arith.constant 0 : index
    %c0_0 = arith.constant 0 : index
    %c0_1 = arith.constant 0 : index
    %0 = vector.load %arg1[%c0, %c0_0, %c0_1] : memref<1x4x256xf32, #tpu.memory_space<vmem>>, vector<1x4x256xf32>
    %cst = arith.constant dense<0.000000e+00> : vector<1x4xf32>
    %1 = vector.multi_reduction <add>, %0, %cst [2] : vector<1x4x256xf32> to vector<1x4xf32>
    %cst_2 = arith.constant dense<0xFF800000> : vector<1x4xf32>
    %2 = vector.multi_reduction <maximumf>, %0, %cst_2 [2] : vector<1x4x256xf32> to vector<1x4xf32>
    %cst_3 = arith.constant 3.906250e-03 : f32
    %3 = vector.broadcast %cst_3 : f32 to vector<1x4xf32>
    %4 = arith.mulf %1, %3 : vector<1x4xf32>
    %c0_4 = arith.constant 0 : index
    %c0_5 = arith.constant 0 : index
    %5 = vector.load %arg2[%c0_4, %c0_5] : memref<4x2xf32, #tpu.memory_space<vmem>>, vector<4x2xf32>
    %cst_6 = arith.constant dense<0.000000e+00> : vector<1x2xf32>
    %6 = tpu.matmul %4, %5, %cst_6 {dimension_numbers = #tpu.dot_dimension_numbers<[1], [0], [0], [1], [0, 0, 1, 1], [], []>} : vector<1x4xf32>, vector<4x2xf32>, vector<1x2xf32> -> vector<1x2xf32>
    %c0_7 = arith.constant 0 : index
    %c0_8 = arith.constant 0 : index
    %7 = vector.load %arg3[%c0_7, %c0_8] : memref<4x2xf32, #tpu.memory_space<vmem>>, vector<4x2xf32>
    %cst_9 = arith.constant dense<0.000000e+00> : vector<1x2xf32>
    %8 = tpu.matmul %2, %7, %cst_9 {dimension_numbers = #tpu.dot_dimension_numbers<[1], [0], [0], [1], [0, 0, 1, 1], [], []>} : vector<1x4xf32>, vector<4x2xf32>, vector<1x2xf32> -> vector<1x2xf32>
    %9 = arith.addf %6, %8 : vector<1x2xf32>
    %c0_10 = arith.constant 0 : index
    %c0_11 = arith.constant 0 : index
    %10 = vector.load %arg4[%c0_10, %c0_11] : memref<1x2xf32, #tpu.memory_space<vmem>>, vector<1x2xf32>
    %11 = arith.addf %9, %10 : vector<1x2xf32>
    %cst_12 = arith.constant 0.000000e+00 : f32
    %12 = vector.broadcast %cst_12 : f32 to vector<1x2xf32>
    %13 = arith.maximumf %11, %12 : vector<1x2xf32>
    %c0_13 = arith.constant 0 : index
    %c0_14 = arith.constant 0 : index
    %14 = vector.load %arg5[%c0_13, %c0_14] : memref<2x4xf32, #tpu.memory_space<vmem>>, vector<2x4xf32>
    %cst_15 = arith.constant dense<0.000000e+00> : vector<1x4xf32>
    %15 = tpu.matmul %13, %14, %cst_15 {dimension_numbers = #tpu.dot_dimension_numbers<[1], [0], [0], [1], [0, 0, 1, 1], [], []>} : vector<1x2xf32>, vector<2x4xf32>, vector<1x4xf32> -> vector<1x4xf32>
    %c0_16 = arith.constant 0 : index
    %c0_17 = arith.constant 0 : index
    %16 = vector.load %arg6[%c0_16, %c0_17] : memref<1x4xf32, #tpu.memory_space<vmem>>, vector<1x4xf32>
    %17 = arith.addf %15, %16 : vector<1x4xf32>
    %18 = arith.negf %17 : vector<1x4xf32>
    %19 = math.exp %18 : vector<1x4xf32>
    %cst_18 = arith.constant 1.000000e+00 : f32
    %20 = vector.broadcast %cst_18 : f32 to vector<1x4xf32>
    %21 = arith.addf %20, %19 : vector<1x4xf32>
    %22 = arith.divf %20, %21 : vector<1x4xf32>
    %c0_19 = arith.constant 0 : index
    %c0_20 = arith.constant 0 : index
    %c0_21 = arith.constant 0 : index
    %23 = vector.load %arg1[%c0_19, %c0_20, %c0_21] : memref<1x4x256xf32, #tpu.memory_space<vmem>>, vector<1x4x256xf32>
    %24 = vector.shape_cast %22 : vector<1x4xf32> to vector<1x4x1xf32>
    %25 = vector.broadcast %24 : vector<1x4x1xf32> to vector<1x4x256xf32>
    %26 = arith.mulf %23, %25 : vector<1x4x256xf32>
    %c0_22 = arith.constant 0 : index
    %c0_23 = arith.constant 0 : index
    %c0_24 = arith.constant 0 : index
    %27 = vector.load %arg7[%c0_22, %c0_23, %c0_24] : memref<1x4x256xf32, #tpu.memory_space<vmem>>, vector<1x4x256xf32>
    tpu.vector_store %arg7[%c0_22, %c0_23, %c0_24], %26 {strides = array<i32>} : memref<1x4x256xf32, #tpu.memory_space<vmem>>, vector<1x4x256xf32>,
    return
  }
  func.func @transform_0(%arg0: i32) -> (i32, i32, i32) {
    %c0_i32 = arith.constant 0 : i32
    %c0_i32_0 = arith.constant 0 : i32
    %c0_i32_1 = arith.constant 0 : i32
    return %arg0, %c0_i32, %c0_i32_0 : i32, i32, i32
  }
  func.func @transform_1(%arg0: i32) -> (i32, i32) {
    %c0_i32 = arith.constant 0 : i32
    %c0_i32_0 = arith.constant 0 : i32
    %c0_i32_1 = arith.constant 0 : i32
    return %c0_i32, %c0_i32_0 : i32, i32
  }
  func.func @transform_2(%arg0: i32) -> (i32, i32) {
    %c0_i32 = arith.constant 0 : i32
    %c0_i32_0 = arith.constant 0 : i32
    %c0_i32_1 = arith.constant 0 : i32
    return %c0_i32, %c0_i32_0 : i32, i32
  }
  func.func @transform_3(%arg0: i32) -> (i32, i32) {
    %c0_i32 = arith.constant 0 : i32
    %c0_i32_0 = arith.constant 0 : i32
    %c0_i32_1 = arith.constant 0 : i32
    return %c0_i32, %c0_i32_0 : i32, i32
  }
  func.func @transform_4(%arg0: i32) -> (i32, i32) {
    %c0_i32 = arith.constant 0 : i32
    %c0_i32_0 = arith.constant 0 : i32
    %c0_i32_1 = arith.constant 0 : i32
    return %c0_i32, %c0_i32_0 : i32, i32
  }
  func.func @transform_5(%arg0: i32) -> (i32, i32) {
    %c0_i32 = arith.constant 0 : i32
    %c0_i32_0 = arith.constant 0 : i32
    %c0_i32_1 = arith.constant 0 : i32
    return %c0_i32, %c0_i32_0 : i32, i32
  }
  func.func @transform_6(%arg0: i32) -> (i32, i32, i32) {
    %c0_i32 = arith.constant 0 : i32
    %c0_i32_0 = arith.constant 0 : i32
    %c0_i32_1 = arith.constant 0 : i32
    return %arg0, %c0_i32, %c0_i32_0 : i32, i32, i32
  }
}

</mosaic_0001>

<llo_original>
// kernel: tpu_custom_call.1
$region0: #{tpu_custom_call.1}
  #allocation0 [shape = 'u32[]', space=smem, size = 0x4, offset = 0x4, fixed_abs, tag = 'smem constant byte address 0x4 - core index']
  #allocation1 [shape = 'u32[72,128]{1,0:T(1,128)}', space=vmem, size = 0x9000, scoped, tag = 'internal scratch']
  %s0 = inlined_call_operand.hbm [shape: f32[2,4,256], index: 0, kind: input, shape index: {}]
  %s1 = inlined_call_operand.vmem [shape: f32[4,2], index: 1, kind: input, shape index: {}]
  %s2 = inlined_call_operand.vmem [shape: f32[4,2], index: 2, kind: input, shape index: {}]
  %s3 = inlined_call_operand.vmem [shape: f32[1,2], index: 3, kind: input, shape index: {}]
  %s4 = inlined_call_operand.vmem [shape: f32[2,4], index: 4, kind: input, shape index: {}]
  %s5 = inlined_call_operand.vmem [shape: f32[1,4], index: 5, kind: input, shape index: {}]
  %s6 = inlined_call_operand.hbm [shape: f32[2,4,256], index: 6, kind: output, shape index: {}]
  %s7 = sld [smem:[#allocation0]]
  $region61: #{tpu_custom_call.1} parent=0
    _
  %s9 = ssub.s32 1, %s7
  %s10 = scalar_select 0, %s9, %s7
  $region1: #{tpu_custom_call.1} parent=0
    #allocation2 [shape = 'u8[8192]{0}', space=vmem, size = 0x2000, scoped, tag = 'input window, operand 0']
    #allocation3 [shape = 's32[2]{0}', space=sflag, size = 0x8, scoped, tag = 'scoped memory for tpu_custom_call.1']
    #allocation4 [shape = 's32[2]{0}', space=sflag, size = 0x8, scoped, tag = 'scoped memory for tpu_custom_call.1']
    #allocation5 [shape = 'u8[8192]{0}', space=vmem, size = 0x2000, scoped, tag = 'output window, operand 0']
    %11 = vsyncpa [#allocation3], 0
    %s12 = scalar_lea.sflag [#allocation3], 1
    %13 = vsyncpa %s12, 0
    %14 = vsyncpa [#allocation4], 0
    %s15 = scalar_lea.sflag [#allocation4], 1
    %16 = vsyncpa %s15, 0
    loop: start=0, step=1, limit=4
    $region2: #{tpu_custom_call.1} parent=1 // loop_pre_header
      _
    $region3: #{tpu_custom_call.1} parent=1 // loop_header
      %s18 = sphi 0, %s22
      %p19 = scmp.ge.s32.totalorder %s18, 4
      %s28 = sphi 0, %s30
      %s31 = sphi 0, %s28
      %s32 = sphi 0, %s31
      %s48 = sphi 0, %s32
      %s52 = sphi 0, %s52
      %s54 = sphi 0, %s52
      %s55 = sphi 0, %s54
      %s69 = sphi 0, %s55
      %s73 = sphi 0, %s73
      %s75 = sphi 0, %s73
      %s76 = sphi 0, %s75
      %s90 = sphi 0, %s76
      %s94 = sphi 0, %s94
      %s96 = sphi 0, %s94
      %s97 = sphi 0, %s96
      %s111 = sphi 0, %s97
      %s115 = sphi 0, %s115
      %s117 = sphi 0, %s115
      %s118 = sphi 0, %s117
      %s132 = sphi 0, %s118
      %s136 = sphi 0, %s136
      %s138 = sphi 0, %s136
      %s139 = sphi 0, %s138
      %s153 = sphi 0, %s139
      %s159 = sphi 0, %s161
      %s162 = sphi 0, %s159
      %s163 = sphi 0, %s162
      %s179 = sphi 0, %s163
    $region4: #{tpu_custom_call.1} parent=1 // loop_header_branch
      %21 = sbr.rel (%p19) target = $region8
    $region5: #{tpu_custom_call.1} parent=1 // loop_body
      %s23 = ssub.s32 %s18, 1
      %s24 = ssub.s32 %s18, 2
      %s25 = sadd.s32 %s18, 1
      %s26 = ssub.s32 %s18, %s25
      %p27 = scmp.eq.s32.totalorder %s26, 0
      %s29 = sadd.s32 %s28, 1
      %s30 = scalar_select %p27, %s28, %s29
      %p33 = pneg %p27
      %p34 = scmp.eq.s32.totalorder %s18, 1
      %p35 = por %p33, %p34
      %p36 = scmp.ne.s32.totalorder %s28, %s31
      %p37 = scmp.eq.s32.totalorder %s18, 0
      %p38 = por %p36, %p37
      %p39 = scmp.ne.s32.totalorder %s28, %s31
      %p40 = scmp.eq.s32.totalorder %s23, 1
      %p41 = por %p39, %p40
      %p42 = scmp.ne.s32.totalorder %s31, %s32
      %p43 = scmp.eq.s32.totalorder %s23, 0
      %p44 = por %p42, %p43
      %p45 = scmp.ne.s32.totalorder %s31, %s32
      %p46 = scmp.eq.s32.totalorder %s24, 1
      %p47 = por %p45, %p46
      %p49 = scmp.ne.s32.totalorder %s32, %s48
      %p50 = scmp.eq.s32.totalorder %s24, 0
      %p51 = por %p49, %p50
      %s53 = sadd.s32 %s52, 1
      %p56 = scmp.eq.s32.totalorder %s18, 1
      %p57 = scmp.ne.s32.totalorder %s52, %s54
      %p58 = scmp.eq.s32.totalorder %s18, 0
      %p59 = por %p57, %p58
      %p60 = scmp.ne.s32.totalorder %s52, %s54
      %p61 = scmp.eq.s32.totalorder %s23, 1
      %p62 = por %p60, %p61
      %p63 = scmp.ne.s32.totalorder %s54, %s55
      %p64 = scmp.eq.s32.totalorder %s23, 0
      %p65 = por %p63, %p64
      %p66 = scmp.ne.s32.totalorder %s54, %s55
      %p67 = scmp.eq.s32.totalorder %s24, 1
      %p68 = por %p66, %p67
      %p70 = scmp.ne.s32.totalorder %s55, %s69
      %p71 = scmp.eq.s32.totalorder %s24, 0
      %p72 = por %p70, %p71
      %s74 = sadd.s32 %s73, 1
      %p77 = scmp.eq.s32.totalorder %s18, 1
      %p78 = scmp.ne.s32.totalorder %s73, %s75
      %p79 = scmp.eq.s32.totalorder %s18, 0
      %p80 = por %p78, %p79
      %p81 = scmp.ne.s32.totalorder %s73, %s75
      %p82 = scmp.eq.s32.totalorder %s23, 1
      %p83 = por %p81, %p82
      %p84 = scmp.ne.s32.totalorder %s75, %s76
      %p85 = scmp.eq.s32.totalorder %s23, 0
      %p86 = por %p84, %p85
      %p87 = scmp.ne.s32.totalorder %s75, %s76
      %p88 = scmp.eq.s32.totalorder %s24, 1
      %p89 = por %p87, %p88
      %p91 = scmp.ne.s32.totalorder %s76, %s90
      %p92 = scmp.eq.s32.totalorder %s24, 0
      %p93 = por %p91, %p92
      %s95 = sadd.s32 %s94, 1
      %p98 = scmp.eq.s32.totalorder %s18, 1
      %p99 = scmp.ne.s32.totalorder %s94, %s96
      %p100 = scmp.eq.s32.totalorder %s18, 0
      %p101 = por %p99, %p100
      %p102 = scmp.ne.s32.totalorder %s94, %s96
      %p103 = scmp.eq.s32.totalorder %s23, 1
      %p104 = por %p102, %p103
      %p105 = scmp.ne.s32.totalorder %s96, %s97
      %p106 = scmp.eq.s32.totalorder %s23, 0
      %p107 = por %p105, %p106
      %p108 = scmp.ne.s32.totalorder %s96, %s97
      %p109 = scmp.eq.s32.totalorder %s24, 1
      %p110 = por %p108, %p109
      %p112 = scmp.ne.s32.totalorder %s97, %s111
      %p113 = scmp.eq.s32.totalorder %s24, 0
      %p114 = por %p112, %p113
      %s116 = sadd.s32 %s115, 1
      %p119 = scmp.eq.s32.totalorder %s18, 1
      %p120 = scmp.ne.s32.totalorder %s115, %s117
      %p121 = scmp.eq.s32.totalorder %s18, 0
      %p122 = por %p120, %p121
      %p123 = scmp.ne.s32.totalorder %s115, %s117
      %p124 = scmp.eq.s32.totalorder %s23, 1
      %p125 = por %p123, %p124
      %p126 = scmp.ne.s32.totalorder %s117, %s118
      %p127 = scmp.eq.s32.totalorder %s23, 0
      %p128 = por %p126, %p127
      %p129 = scmp.ne.s32.totalorder %s117, %s118
      %p130 = scmp.eq.s32.totalorder %s24, 1
      %p131 = por %p129, %p130
      %p133 = scmp.ne.s32.totalorder %s118, %s132
      %p134 = scmp.eq.s32.totalorder %s24, 0
      %p135 = por %p133, %p134
      %s137 = sadd.s32 %s136, 1
      %p140 = scmp.eq.s32.totalorder %s18, 1
      %p141 = scmp.ne.s32.totalorder %s136, %s138
      %p142 = scmp.eq.s32.totalorder %s18, 0
      %p143 = por %p141, %p142
      %p144 = scmp.ne.s32.totalorder %s136, %s138
      %p145 = scmp.eq.s32.totalorder %s23, 1
      %p146 = por %p144, %p145
      %p147 = scmp.ne.s32.totalorder %s138, %s139
      %p148 = scmp.eq.s32.totalorder %s23, 0
      %p149 = por %p147, %p148
      %p150 = scmp.ne.s32.totalorder %s138, %s139
      %p151 = scmp.eq.s32.totalorder %s24, 1
      %p152 = por %p150, %p151
      %p154 = scmp.ne.s32.totalorder %s139, %s153
      %p155 = scmp.eq.s32.totalorder %s24, 0
      %p156 = por %p154, %p155
      %s157 = ssub.s32 %s18, %s25
      %p158 = scmp.eq.s32.totalorder %s157, 0
      %s160 = sadd.s32 %s159, 1
      %s161 = scalar_select %p158, %s159, %s160
      %p164 = pneg %p158
      %p165 = scmp.eq.s32.totalorder %s18, 1
      %p166 = por %p164, %p165
      %p167 = scmp.ne.s32.totalorder %s159, %s162
      %p168 = scmp.eq.s32.totalorder %s18, 0
      %p169 = por %p167, %p168
      %p170 = scmp.ne.s32.totalorder %s159, %s162
      %p171 = scmp.eq.s32.totalorder %s23, 1
      %p172 = por %p170, %p171
      %p173 = scmp.ne.s32.totalorder %s162, %s163
      %p174 = scmp.eq.s32.totalorder %s23, 0
      %p175 = por %p173, %p174
      %p176 = scmp.ne.s32.totalorder %s162, %s163
      %p177 = scmp.eq.s32.totalorder %s24, 1
      %p178 = por %p176, %p177
      %p180 = scmp.ne.s32.totalorder %s163, %s179
      %p181 = scmp.eq.s32.totalorder %s24, 0
      %p182 = por %p180, %p181
      %p183 = scmp.le.s32.totalorder 1, %s18
      %p184 = scmp.lt.s32.totalorder %s18, 3
      %p185 = pnand %p183, %p184
      %p186 = pneg %p185
      // Predicated region
      $region9: #{tpu_custom_call.1} parent=5 // pred_check
        _
      $region10: #{tpu_custom_call.1} parent=5 // pred_check_branch
        %188 = sbr.rel (%p185) target = $region12
      $region11: #{tpu_custom_call.1} parent=5 // pred_region
        %s189 = ssub.s32 %s18, 1
        // Predicated region
        $region13: #{tpu_custom_call.1} parent=11 // pred_check
          %p190 = pneg %p65
        $region14: #{tpu_custom_call.1} parent=11 // pred_check_branch
          %192 = sbr.rel (%p190) target = $region16
        $region15: #{tpu_custom_call.1} parent=11 // pred_region
          _
        $region16: #{tpu_custom_call.1} parent=11 // pred_fallthru
          _
        // Predicated region
        $region17: #{tpu_custom_call.1} parent=11 // pred_check
          %p193 = pneg %p86
        $region18: #{tpu_custom_call.1} parent=11 // pred_check_branch
          %195 = sbr.rel (%p193) target = $region20
        $region19: #{tpu_custom_call.1} parent=11 // pred_region
          _
        $region20: #{tpu_custom_call.1} parent=11 // pred_fallthru
          _
        // Predicated region
        $region21: #{tpu_custom_call.1} parent=11 // pred_check
          %p196 = pneg %p107
        $region22: #{tpu_custom_call.1} parent=11 // pred_check_branch
          %198 = sbr.rel (%p196) target = $region24
        $region23: #{tpu_custom_call.1} parent=11 // pred_region
          _
        $region24: #{tpu_custom_call.1} parent=11 // pred_fallthru
          _
        // Predicated region
        $region25: #{tpu_custom_call.1} parent=11 // pred_check
          %p199 = pneg %p128
        $region26: #{tpu_custom_call.1} parent=11 // pred_check_branch
          %201 = sbr.rel (%p199) target = $region28
        $region27: #{tpu_custom_call.1} parent=11 // pred_region
          _
        $region28: #{tpu_custom_call.1} parent=11 // pred_fallthru
          _
        // Predicated region
        $region29: #{tpu_custom_call.1} parent=11 // pred_check
          %p202 = pneg %p149
        $region30: #{tpu_custom_call.1} parent=11 // pred_check_branch
          %204 = sbr.rel (%p202) target = $region32
        $region31: #{tpu_custom_call.1} parent=11 // pred_region
          _
        $region32: #{tpu_custom_call.1} parent=11 // pred_fallthru
          _
      $region12: #{tpu_custom_call.1} parent=5 // pred_fallthru
        _
      %p205 = scmp.lt.s32.totalorder %s18, 2
      // Predicated region
      $region33: #{tpu_custom_call.1} parent=5 // pred_check
        %p206 = pneg %p205
      $region34: #{tpu_custom_call.1} parent=5 // pred_check_branch
        %208 = sbr.rel (%p206) target = $region36
      $region35: #{tpu_custom_call.1} parent=5 // pred_region
        // Predicated region
        $region37: #{tpu_custom_call.1} parent=35 // pred_check
          %p209 = pneg %p38
        $region38: #{tpu_custom_call.1} parent=35 // pred_check_branch
          %211 = sbr.rel (%p209) target = $region40
        $region39: #{tpu_custom_call.1} parent=35 // pred_region
          %s212 = sand.u32 %s28, 1
          %s213 = scalar_lea.sflag [#allocation3], %s212
          %s214 = sand.u32 %s28, 1
          %s215 = smul.addr %s214, 8
          %s216 = scalar_lea.vmem [#allocation2], %s215
          %218 = vsyncadd %s213, 0
          %s219 = smul.addr %s18, 2
          %s220 = smul.addr %s219, 4
          %s221 = scalar_lea.hbm %s0, %s220
          %s223 = sshll.u32 %s221, 4
          %s224 = int_to_ptr.hbm [resolvable:$true] %s223
          %s225 = sshll.u32 %s216, 4
          %s226 = int_to_ptr.vmem [resolvable:$true] %s225
          %228 = dma.hbm_to_vmem [thread:$0]  %s224, 128, %s226, %s213
        $region40: #{tpu_custom_call.1} parent=35 // pred_fallthru
          _
      $region36: #{tpu_custom_call.1} parent=5 // pred_fallthru
        _
      %p229 = scmp.le.s32.totalorder 1, %s18
      %p230 = scmp.lt.s32.totalorder %s18, 3
      %p231 = pnand %p229, %p230
      %p232 = pneg %p231
      // Predicated region
      $region41: #{tpu_custom_call.1} parent=5 // pred_check
        _
      $region42: #{tpu_custom_call.1} parent=5 // pred_check_branch
        %234 = sbr.rel (%p231) target = $region44
      $region43: #{tpu_custom_call.1} parent=5 // pred_region
        %s235 = ssub.s32 %s18, 1
        %s236 = sand.u32 %s31, 1
        %s237 = scalar_lea.sflag [#allocation3], %s236
        %s238 = sand.u32 %s31, 1
        %s239 = smul.addr %s238, 8
        %s240 = scalar_lea.vmem [#allocation2], %s239
        // Predicated region
        $region45: #{tpu_custom_call.1} parent=43 // pred_check
          %p241 = pneg %p44
        $region46: #{tpu_custom_call.1} parent=43 // pred_check_branch
          %243 = sbr.rel (%p241) target = $region48
        $region47: #{tpu_custom_call.1} parent=43 // pred_region
          %245 = dma.done %s237, 128
        $region48: #{tpu_custom_call.1} parent=43 // pred_fallthru
          _
        %s246 = sand.u32 %s31, 1
        %s247 = scalar_lea.sflag [#allocation3], %s246
        %s248 = sand.u32 %s31, 1
        %s249 = smul.addr %s248, 8
        %s250 = scalar_lea.vmem [#allocation2], %s249
        %p251 = pneg %p44
        %p252 = pneg %p41
        %p253 = pneg %p65
        %p254 = pneg %p62
        %p255 = pneg %p86
        %p256 = pneg %p83
        %p257 = pneg %p107
        %p258 = pneg %p104
        %p259 = pneg %p128
        %p260 = pneg %p125
        %p261 = pneg %p149
        %p262 = pneg %p146
        %p263 = pneg %p175
        %p264 = pneg %p172
        %s265 = sand.u32 %s162, 1
        %s266 = scalar_lea.sflag [#allocation4], %s265
        %s267 = sand.u32 %s162, 1
        %s268 = smul.addr %s267, 8
        %s269 = scalar_lea.vmem [#allocation5], %s268
        %v270 = vld [vmem:[%s240] sm:$0xff]
        %272 = vst [vmem:[#allocation1] ss:$2 sm:$0xff] %v270
        %v273 = vld.sshfl [vmem:[#allocation1] sm:$0xff pattern:$0x75316420]
        %v274 = vld.sshfl [vmem:[#allocation1 + $0x8] sm:$0xff pattern:$0x75316420]
        %vm277 = vcmask 1043456
        %v278 = vsel %vm277, %v273, 0.0
        %v279 = vsel %vm277, %v274, 0.0
        %v280 = vadd.f32 %v278, %v279
        %281 = vadd.xlane.f32.xlu0 %v280
        %v282 = vpop.xlane.xlu0 %281
        %283 = vst [vmem:[#allocation1] ss:$2 sm:$0xff] %v270
        %v284 = vld.sshfl [vmem:[#allocation1] sm:$0xff pattern:$0x75316420]
        %v285 = vld.sshfl [vmem:[#allocation1 + $0x8] sm:$0xff pattern:$0x75316420]
        %v288 = vsel %vm277, %v284, -inf
        %v289 = vsel %vm277, %v285, -inf
        %v290 = vmax.f32 %v288, %v289
        %291 = vmax.xlane.f32.xlu0 %v290
        %v292 = vpop.xlane.xlu0 %291
        %v293 = vmul.f32 %v282, 0.00390625
        %v294 = vld [vmem:[%s1] sm:$0xf]
        %v295 = vld [vmem:[%s2] sm:$0xf]
        %v297 = vlaneseq
        %v298 = vand.u32 %v297, 127
        %v299 = vperm.slane %v292, %v298
        %vm300 = vcmask 31744
        %v301 = vsel %vm300, %v299, 0
        %v304 = vsel %vm277, %v295, 0
        %306 = vmatpush.msra.mxu0 0.0
        %307 = vmatpush.msra.mxu0 0.0
        %308 = vmatpush.msra.mxu0 0.0
        %309 = vmatpush.msra.mxu0 0.0
        %310 = vmatpush.msra.mxu0 0.0
        %311 = vmatpush.msra.mxu0 0.0
        %312 = vmatpush.msra.mxu0 0.0
        %313 = vmatpush.msra.mxu0 0.0
        %314 = vmatpush.msra.mxu0 0.0
        %315 = vmatpush.msra.mxu0 0.0
        %316 = vmatpush.msra.mxu0 0.0
        %317 = vmatpush.msra.mxu0 0.0
        %318 = vmatpush.msra.mxu0 0.0
        %319 = vmatpush.msra.mxu0 0.0
        %320 = vmatpush.msra.mxu0 0.0
        %321 = vmatpush.msra.mxu0 %v304
        %322 = vmatmul.f32.gmra.mxu0 %v301
        %v323 = vpop.f32.mrf.mxu0
        %v324 = vadd.f32 0.0, %v323
        %325 = vdwg.mxu0
        %v327 = vperm.slane %v293, %v298
        %v328 = vsel %vm300, %v327, 0
        %v331 = vsel %vm277, %v294, 0
        %333 = vmatpush.msra.mxu0 0.0
        %334 = vmatpush.msra.mxu0 0.0
        %335 = vmatpush.msra.mxu0 0.0
        %336 = vmatpush.msra.mxu0 0.0
        %337 = vmatpush.msra.mxu0 0.0
        %338 = vmatpush.msra.mxu0 0.0
        %339 = vmatpush.msra.mxu0 0.0
        %340 = vmatpush.msra.mxu0 0.0
        %341 = vmatpush.msra.mxu0 0.0
        %342 = vmatpush.msra.mxu0 0.0
        %343 = vmatpush.msra.mxu0 0.0
        %344 = vmatpush.msra.mxu0 0.0
        %345 = vmatpush.msra.mxu0 0.0
        %346 = vmatpush.msra.mxu0 0.0
        %347 = vmatpush.msra.mxu0 0.0
        %348 = vmatpush.msra.mxu0 %v331
        %349 = vmatmul.f32.gmra.mxu0 %v328
        %v350 = vpop.f32.mrf.mxu0
        %v351 = vadd.f32 %v324, %v350
        %352 = vdwg.mxu0
        %v353 = vld [vmem:[%s3] sm:$0x1]
        %v354 = vadd.f32 %v351, %v353
        %v355 = vmax.f32 %v354, 0.0
        %v356 = vld [vmem:[%s4] sm:$0x3]
        %v357 = vld [vmem:[%s5] sm:$0x1]
        %vm358 = vcmask 15360
        %v360 = vsel %vm358, %v355, 0
        %vm362 = vcmask 1041408
        %v364 = vsel %vm362, %v356, 0
        %366 = vmatpush.msra.mxu0 0.0
        %367 = vmatpush.msra.mxu0 0.0
        %368 = vmatpush.msra.mxu0 0.0
        %369 = vmatpush.msra.mxu0 0.0
        %370 = vmatpush.msra.mxu0 0.0
        %371 = vmatpush.msra.mxu0 0.0
        %372 = vmatpush.msra.mxu0 0.0
        %373 = vmatpush.msra.mxu0 0.0
        %374 = vmatpush.msra.mxu0 0.0
        %375 = vmatpush.msra.mxu0 0.0
        %376 = vmatpush.msra.mxu0 0.0
        %377 = vmatpush.msra.mxu0 0.0
        %378 = vmatpush.msra.mxu0 0.0
        %379 = vmatpush.msra.mxu0 0.0
        %380 = vmatpush.msra.mxu0 0.0
        %381 = vmatpush.msra.mxu0 %v364
        %382 = vmatmul.f32.gmra.mxu0 %v360
        %v383 = vpop.f32.mrf.mxu0
        %v384 = vadd.f32 %v357, %v383
        %385 = vdwg.mxu0
        %v386 = vxor.u32 %v384, 2147483648
        %v387 = vmul.f32 %v386, 1.442695
        %v388 = vpow.pop %v387
        %v389 = vadd.f32 %v388, 1.0
        %v390 = vrcp.pop %v389
        %v391 = vmul.f32 %v389, %v390
        %v392 = vsub.f32 1.0, %v391
        %v393 = vmul.f32 %v390, %v392
        %v394 = vadd.f32 %v390, %v393
        %vm395 = vweird.f32 %v389
        %vm396 = vweird.f32 %v390
        %vm397 = vmor %vm395, %vm396
        %v398 = vsel %vm397, %v390, %v394
        %v399 = vand.u32 2147483647, %v389
        %vm400 = vcmp.eq.f32.partialorder %v399, 8.507059e+37
        %v401 = vand.u32 %v389, 2147483648
        %v402 = vor.u32 1.1754944e-38, %v401
        %v403 = vsel %vm400, %v402, %v398
        %v404 = vmul.f32 1.0, %v403
        %v405 = vperm.slane %v404, 0
        %v406 = vlaneseq
        %v407 = vshrl.u32 %v406, 7
        %409 = vset.pattern.permute.xlu0 %v407
        %410 = vperm.xlu0 %409, %v405
        %v411 = vpop.permute.xlu0 %410
        %v414 = vunpack.c.l.s4 839922192
        %v415 = vunpack.c.0.s8 %v414
        %v416 = vperm.slane %v411, %v415
        %v418 = vmul.f32 %v270, %v416
        %419 = vst [vmem:[%s269] sm:$0xff] %v418
        %s420 = sand.u32 %s162, 1
        %s421 = scalar_lea.sflag [#allocation4], %s420
        %s422 = sand.u32 %s162, 1
        %s423 = smul.addr %s422, 8
        %s424 = scalar_lea.vmem [#allocation5], %s423
        // Predicated region
        $region49: #{tpu_custom_call.1} parent=43 // pred_check
          %p425 = pneg %p172
        $region50: #{tpu_custom_call.1} parent=43 // pred_check_branch
          %427 = sbr.rel (%p425) target = $region52
        $region51: #{tpu_custom_call.1} parent=43 // pred_region
          %429 = vsyncadd %s421, 0
          %s430 = smul.addr %s23, 2
          %s431 = smul.addr %s430, 4
          %s432 = scalar_lea.hbm %s6, %s431
          %s434 = sshll.u32 %s424, 4
          %s435 = int_to_ptr.vmem [resolvable:$true] %s434
          %s436 = sshll.u32 %s432, 4
          %s437 = int_to_ptr.hbm [resolvable:$true] %s436
          %439 = dma.vmem_to_hbm [thread:$0]  %s435, 128, %s437, %s421
        $region52: #{tpu_custom_call.1} parent=43 // pred_fallthru
          _
      $region44: #{tpu_custom_call.1} parent=5 // pred_fallthru
        _
      %p440 = scmp.le.s32.totalorder 2, %s18
      // Predicated region
      $region53: #{tpu_custom_call.1} parent=5 // pred_check
        %p441 = pneg %p440
      $region54: #{tpu_custom_call.1} parent=5 // pred_check_branch
        %443 = sbr.rel (%p441) target = $region56
      $region55: #{tpu_custom_call.1} parent=5 // pred_region
        %s444 = ssub.s32 %s18, 2
        // Predicated region
        $region57: #{tpu_custom_call.1} parent=55 // pred_check
          %p445 = pneg %p178
        $region58: #{tpu_custom_call.1} parent=55 // pred_check_branch
          %447 = sbr.rel (%p445) target = $region60
        $region59: #{tpu_custom_call.1} parent=55 // pred_region
          %s448 = sand.u32 %s163, 1
          %s449 = scalar_lea.sflag [#allocation4], %s448
          %s450 = sand.u32 %s163, 1
          %s451 = smul.addr %s450, 8
          %s452 = scalar_lea.vmem [#allocation5], %s451
          %454 = dma.done %s449, 128
        $region60: #{tpu_custom_call.1} parent=55 // pred_fallthru
          _
      $region56: #{tpu_custom_call.1} parent=5 // pred_fallthru
        _
    $region6: #{tpu_custom_call.1} parent=1 // loop_footer
      %s22 = sadd.s32 1, %s18
    $region7: #{tpu_custom_call.1} parent=1 // loop_footer_branch
      %17 = sbr.rel target = $region3
    $region8: #{tpu_custom_call.1} parent=1 // loop_exit
      _
    %455 = vsyncpa [#allocation3], 1
    %s456 = scalar_lea.sflag [#allocation3], 1
    %457 = vsyncpa %s456, 1
    %458 = vsyncpa [#allocation4], 1
    %s459 = scalar_lea.sflag [#allocation4], 1
    %460 = vsyncpa %s459, 1

</llo_original>
